<compile_context>
chip_gen: v7x
topology: tpu7x:2x2x1
jax: 0.10.0
libtpu: 0.0.40
codegen_flags: <defaults>
</compile_context>

<pallas_src>
import jax
import jax.numpy as jnp
from jax.experimental import pallas as pl
from jax.experimental.pallas import tpu as pltpu

_MIB = 1024 * 1024


def _round_up(v, m):
    return (v + m - 1) // m * m


def _pick_tile(extent, target):
    """Largest multiple-of-128 tile <= target that divides `extent`.

    `extent` is always a multiple of 128, so this terminates at 128.
    """
    t = min(target, extent)
    t = max(128, t - t % 128)
    while extent % t != 0:
        t -= 128
    return max(t, 128)


def _vmem_capacity_bytes():
    """Physical VMEM per TensorCore; conservative fallback = v7x (64 MiB)."""
    try:
        return int(pltpu.get_tpu_info().vmem_capacity_bytes)
    except Exception:
        return 64 * _MIB


# ---------------------------------------------------------------------------
# Kernel 1: support = x @ W   (dropout == identity in eval mode)
# ---------------------------------------------------------------------------
def support_kernel(x_ref, w_ref, o_ref):
    s = jnp.dot(x_ref[...], w_ref[...], preferred_element_type=jnp.float32)
    o_ref[...] = s.astype(o_ref.dtype)


# ---------------------------------------------------------------------------
# Kernel 2: out = relu(adj @ support), tiled K-reduction over node tiles.
#   grid = (row tiles i, contraction tiles k); adj streamed.
#   Two variants: support fully VMEM-resident, or streamed per k-tile.
# ---------------------------------------------------------------------------
def aggregate_kernel_resident(adj_ref, support_ref, o_ref, acc_ref):
    k = pl.program_id(1)
    tk = adj_ref.shape[1]  # contraction tile size (static)

    @pl.when(k == 0)
    def _():
        acc_ref[...] = jnp.zeros_like(acc_ref)

    off = pl.multiple_of(k * tk, tk)
    acc_ref[...] += jnp.dot(adj_ref[...], support_ref[pl.ds(off, tk), :],
                            preferred_element_type=jnp.float32)

    @pl.when(k == pl.num_programs(1) - 1)
    def _():
        o_ref[...] = jnp.maximum(acc_ref[...], 0.0).astype(o_ref.dtype)


def aggregate_kernel_streamed(adj_ref, support_ref, o_ref, acc_ref):
    k = pl.program_id(1)

    @pl.when(k == 0)
    def _():
        acc_ref[...] = jnp.zeros_like(acc_ref)

    acc_ref[...] += jnp.dot(adj_ref[...], support_ref[...],
                            preferred_element_type=jnp.float32)

    @pl.when(k == pl.num_programs(1) - 1)
    def _():
        o_ref[...] = jnp.maximum(acc_ref[...], 0.0).astype(o_ref.dtype)


# ---------------------------------------------------------------------------
# adj preparation (hoist the pad + dtype cast out of the per-layer call)
# ---------------------------------------------------------------------------
def prepare_adjacency(adj, compute_dtype=None):
    """Pad (to a multiple of 128) and optionally cast adj ONCE per graph.

    Pass the returned array to graph_convolution for every GCN layer to avoid
    re-reading/re-writing the dominant n^2 matrix on each call.
    """
    n = adj.shape[0]
    assert adj.shape == (n, n)
    if compute_dtype is not None:
        adj = adj.astype(compute_dtype)
    n_pad = _round_up(n, 128)
    if n_pad != n:
        adj = jnp.pad(adj, ((0, n_pad - n), (0, n_pad - n)))
    return adj


# ---------------------------------------------------------------------------
# Wrapper
# ---------------------------------------------------------------------------
def graph_convolution(x, adj, weight, *, compute_dtype=None):
    """relu(adj @ (x @ weight)) with dropout as identity (eval mode).

    x:       (N, F_in)
    adj:     either the raw (N, N) adjacency, or the output of
             prepare_adjacency() (pre-padded to (N_pad, N_pad), pre-cast).
    weight:  (F_in, F_out)
    compute_dtype: optional (e.g. jnp.bfloat16) MXU-rate compute path;
             accumulation stays f32, output keeps x's original dtype.
    """
    n, f_in = x.shape
    f_in_w, f_out = weight.shape
    assert f_in == f_in_w

    out_dtype = x.dtype
    x_cdtype = compute_dtype if compute_dtype is not None else x.dtype
    adj_cdtype = compute_dtype if compute_dtype is not None else adj.dtype

    # ---- Padded extents (feature dims to lane width, nodes to 128) ----------
    k_pad = _round_up(f_in, 128)     # contraction width of x @ W
    f_pad = _round_up(f_out, 128)    # minimal lane-dense output width
    n_pad = _round_up(n, 128)

    # ---- adj: accept pre-prepared (padded/cast) or prepare here -------------
    if adj.shape == (n_pad, n_pad):
        adj_p = adj if adj.dtype == adj_cdtype else adj.astype(adj_cdtype)
    elif adj.shape == (n, n):
        adj_p = prepare_adjacency(adj, compute_dtype=adj_cdtype)
    else:
        raise ValueError(f"adj shape {adj.shape} incompatible with N={n}")

    # ---- x / W padding (small; per-layer anyway) -----------------------------
    x_p = jnp.pad(x.astype(x_cdtype), ((0, n_pad - n), (0, k_pad - f_in)))
    w_p = jnp.pad(weight.astype(x_cdtype),
                  ((0, k_pad - f_in), (0, f_pad - f_out)))

    adj_item = jnp.dtype(adj_cdtype).itemsize
    sup_item = jnp.dtype(x_cdtype).itemsize
    out_item = jnp.dtype(out_dtype).itemsize

    # ---- Generation-aware VMEM budget ----------------------------------------
    vmem_cap = _vmem_capacity_bytes()
    budget = int(vmem_cap * 0.80)

    # ---- Kernel-2 tiling: decouple row tile from contraction tile ------------
    tk_target = 2048 if adj_item <= 2 else 1024
    tm_target = 256
    tile_m = _pick_tile(n_pad, tm_target)
    tile_k = _pick_tile(n_pad, tk_target)

    supp_bytes = n_pad * f_pad * sup_item
    support_resident = supp_bytes <= budget // 3   # size guard (v7x 64 MiB/TC)

    def k2_need(tm, tk):
        adj_b = 2 * tm * tk * adj_item                       # streamed, 2 bufs
        supp_b = supp_bytes if support_resident else 2 * tk * f_pad * sup_item
        acc_b = tm * f_pad * 4                               # f32 accumulator
        out_b = 2 * tm * f_pad * out_item
        return adj_b + supp_b + acc_b + out_b

    while k2_need(tile_m, tile_k) > budget and tile_k > 128:
        tile_k = _pick_tile(n_pad, tile_k - 128)
    while k2_need(tile_m, tile_k) > budget and tile_m > 128:
        tile_m = _pick_tile(n_pad, tile_m - 128)

    vmem_limit_2 = min(budget, max(k2_need(tile_m, tile_k) + 8 * _MIB, 32 * _MIB))

    # ---- Kernel-1 tiling (trivially small, mem-bound matmul) -----------------
    tile_r1 = _pick_tile(n_pad, 512)

    def k1_need(tr):
        return (2 * tr * k_pad * sup_item          # x row tile, 2 bufs
                + k_pad * f_pad * sup_item         # W, single-buffered
                + 2 * tr * f_pad * sup_item)       # support out tile, 2 bufs

    while k1_need(tile_r1) > budget and tile_r1 > 128:
        tile_r1 = _pick_tile(n_pad, tile_r1 - 128)

    vmem_limit_1 = min(budget, max(k1_need(tile_r1) + 8 * _MIB, 32 * _MIB))

    # ---- Kernel 1: support = x @ W  -> (n_pad, f_pad) in compute dtype -------
    support = pl.pallas_call(
        support_kernel,
        out_shape=jax.ShapeDtypeStruct((n_pad, f_pad), x_cdtype),
        grid_spec=pltpu.PrefetchScalarGridSpec(
            num_scalar_prefetch=0,
            grid=(n_pad // tile_r1,),
            in_specs=[
                pl.BlockSpec((tile_r1, k_pad), lambda i: (i, 0)),
                # W: constant block index -> single-buffered resident copy.
                pl.BlockSpec((k_pad, f_pad), lambda i: (0, 0),
                             pipeline_mode=pl.Buffered(1)),
            ],
            out_specs=pl.BlockSpec((tile_r1, f_pad), lambda i: (i, 0)),
        ),
        compiler_params=pltpu.CompilerParams(
            dimension_semantics=("parallel",),
            vmem_limit_bytes=vmem_limit_1,
        ),
        cost_estimate=pl.CostEstimate(
            flops=2 * n_pad * k_pad * f_pad,
            transcendentals=0,
            bytes_accessed=(n_pad * k_pad + k_pad * f_pad + n_pad * f_pad)
            * sup_item,
        ),
    )(x_p, w_p)

    # ---- Kernel 2: out = relu(adj @ support), tiled reduction over nodes -----
    if support_resident:
        agg_kernel = aggregate_kernel_resident
        support_spec = pl.BlockSpec((n_pad, f_pad), lambda i, k: (0, 0),
                                    pipeline_mode=pl.Buffered(1))
    else:
        agg_kernel = aggregate_kernel_streamed
        support_spec = pl.BlockSpec((tile_k, f_pad), lambda i, k: (k, 0))

    out_p = pl.pallas_call(
        agg_kernel,
        out_shape=jax.ShapeDtypeStruct((n_pad, f_pad), out_dtype),
        grid_spec=pltpu.PrefetchScalarGridSpec(
            num_scalar_prefetch=0,
            grid=(n_pad // tile_m, n_pad // tile_k),
            in_specs=[
                # adj (tile_m, tile_k) block, streamed / double-buffered.
                pl.BlockSpec((tile_m, tile_k), lambda i, k: (i, k)),
                support_spec,
            ],
            out_specs=pl.BlockSpec((tile_m, f_pad), lambda i, k: (i, 0)),
            scratch_shapes=[pltpu.VMEM((tile_m, f_pad), jnp.float32)],
        ),
        compiler_params=pltpu.CompilerParams(
            dimension_semantics=("parallel", "arbitrary"),
            vmem_limit_bytes=vmem_limit_2,
        ),
        cost_estimate=pl.CostEstimate(
            flops=2 * n_pad * n_pad * f_pad,
            transcendentals=0,
            bytes_accessed=n_pad * n_pad * adj_item
            + n_pad * f_pad * sup_item
            + n_pad * f_pad * out_item,
        ),
    )(adj_p, support)

    return out_p[:n, :f_out]


def xavier_uniform(key, shape, dtype=jnp.float32):
    fan_in, fan_out = shape
    bound = jnp.sqrt(6.0 / (fan_in + fan_out))
    return jax.random.uniform(key, shape, dtype, minval=-bound, maxval=bound)


if __name__ == "__main__":
    in_features, out_features = 32, 64
    num_nodes = 16

    key = jax.random.PRNGKey(0)
    k_w, k_x, k_adj = jax.random.split(key, 3)

    weight = xavier_uniform(k_w, (in_features, out_features))
    x = jax.random.normal(k_x, (num_nodes, in_features), dtype=jnp.float32)
    # Symmetric, row-normalized-ish adjacency (deterministic).
    a = jax.random.uniform(k_adj, (num_nodes, num_nodes), dtype=jnp.float32)
    adj = (a + a.T) * 0.5 + jnp.eye(num_nodes, dtype=jnp.float32)
    adj = adj / jnp.sum(adj, axis=-1, keepdims=True)

    # Pure-JAX reference (eval-mode forward of the PyTorch module).
    ref = jnp.maximum(adj @ (x @ weight), 0.0)

    # f32 path, raw adj (pad/cast done inside): matches reference tightly.
    out = graph_convolution(x, adj, weight)
    out = jax.block_until_ready(out)
    assert out.shape == (num_nodes, out_features)
    assert jnp.allclose(out, ref, atol=1e-5, rtol=1e-5)

    # Pre-prepared (hoisted pad) adjacency, reused across two "layers".
    adj_prepared = prepare_adjacency(adj)
    out_l1 = graph_convolution(x, adj_prepared, weight)
    out_l1 = jax.block_until_ready(out_l1)
    assert jnp.allclose(out_l1, ref, atol=1e-5, rtol=1e-5)

    # bf16 compute path (MXU-rate / half adj bytes): loose tolerance vs f32.
    adj_prepared_bf16 = prepare_adjacency(adj, compute_dtype=jnp.bfloat16)
    out_bf16 = graph_convolution(x, adj_prepared_bf16, weight,
                                 compute_dtype=jnp.bfloat16)
    out_bf16 = jax.block_until_ready(out_bf16)
    assert out_bf16.shape == (num_nodes, out_features)
    assert jnp.allclose(out_bf16, ref, atol=5e-2, rtol=5e-2)

    print("KERNEL_OK")
</pallas_src>

<mosaic_0001>
module attributes {stable_mosaic.version = 11 : i64} {
  func.func @support_kernel(%arg0: i32, %arg1: memref<128x128xf32, #tpu.memory_space<vmem>>, %arg2: memref<128x128xf32, #tpu.memory_space<vmem>>, %arg3: memref<128x128xf32, #tpu.memory_space<vmem>>) attributes {dimension_semantics = [#tpu.dimension_semantics<parallel>], iteration_bounds = array<i64: 1>, scalar_prefetch = 0 : i64, scratch_operands = 0 : i64, tpu.core_type = #tpu.core_type<tc>, window_params = [{transform_indices = @transform_0, window_bounds = array<i64: 128, 128>}, {pipeline_mode = #tpu.pipeline_mode<synchronous>, transform_indices = @transform_1, window_bounds = array<i64: 128, 128>}, {transform_indices = @transform_2, window_bounds = array<i64: 128, 128>}]} {
    %c0 = arith.constant 0 : index
    %c0_0 = arith.constant 0 : index
    %0 = vector.load %arg1[%c0, %c0_0] : memref<128x128xf32, #tpu.memory_space<vmem>>, vector<128x128xf32>
    %c0_1 = arith.constant 0 : index
    %c0_2 = arith.constant 0 : index
    %1 = vector.load %arg2[%c0_1, %c0_2] : memref<128x128xf32, #tpu.memory_space<vmem>>, vector<128x128xf32>
    %cst = arith.constant dense<0.000000e+00> : vector<128x128xf32>
    %2 = tpu.matmul %0, %1, %cst {dimension_numbers = #tpu.dot_dimension_numbers<[1], [0], [0], [1], [0, 0, 1, 1], [], []>} : vector<128x128xf32>, vector<128x128xf32>, vector<128x128xf32> -> vector<128x128xf32>
    %c0_3 = arith.constant 0 : index
    %c0_4 = arith.constant 0 : index
    %3 = vector.load %arg3[%c0_3, %c0_4] : memref<128x128xf32, #tpu.memory_space<vmem>>, vector<128x128xf32>
    tpu.vector_store %arg3[%c0_3, %c0_4], %2 {strides = array<i32>} : memref<128x128xf32, #tpu.memory_space<vmem>>, vector<128x128xf32>,
    return
  }
  func.func @transform_0(%arg0: i32) -> (i32, i32) {
    %c0_i32 = arith.constant 0 : i32
    %c0_i32_0 = arith.constant 0 : i32
    return %arg0, %c0_i32 : i32, i32
  }
  func.func @transform_1(%arg0: i32) -> (i32, i32) {
    %c0_i32 = arith.constant 0 : i32
    %c0_i32_0 = arith.constant 0 : i32
    %c0_i32_1 = arith.constant 0 : i32
    return %c0_i32, %c0_i32_0 : i32, i32
  }
  func.func @transform_2(%arg0: i32) -> (i32, i32) {
    %c0_i32 = arith.constant 0 : i32
    %c0_i32_0 = arith.constant 0 : i32
    return %arg0, %c0_i32 : i32, i32
  }
}

</mosaic_0001>

<llo_original>
// kernel: tpu_custom_call.1
$region0: #{tpu_custom_call.1}
  #allocation0 [shape = 'u32[]', space=smem, size = 0x4, offset = 0x4, fixed_abs, tag = 'smem constant byte address 0x4 - core index']
  #allocation1 [shape = 'u32[144,128]{1,0:T(1,128)}', space=vmem, size = 0x12000, scoped, tag = 'internal scratch']
  %s0 = inlined_call_operand.hbm [shape: f32[128,128], index: 0, kind: input, shape index: {}]
  %s1 = inlined_call_operand.hbm [shape: f32[128,128], index: 1, kind: input, shape index: {}]
  %s2 = inlined_call_operand.hbm [shape: f32[128,128], index: 2, kind: output, shape index: {}]
  %s3 = sld [smem:[#allocation0]]
  $region26: #{tpu_custom_call.1} parent=0
    _
  %s5 = ssub.s32 1, %s3
  %s6 = scalar_select 0, %s5, %s3
  $region1: #{tpu_custom_call.1} parent=0
    #allocation2 [shape = 'u8[65536]{0}', space=vmem, size = 0x10000, scoped, tag = 'input window, operand 0, single buffered']
    #allocation3 [shape = 's32[1]{0}', space=sflag, size = 0x4, scoped, tag = 'scoped memory for tpu_custom_call.1']
    #allocation4 [shape = 's32[1]{0}', space=sflag, size = 0x4, scoped, tag = 'scoped memory for tpu_custom_call.1']
    #allocation5 [shape = 'u8[65536]{0}', space=vmem, size = 0x10000, scoped, tag = 'input window, operand 1, single buffered']
    #allocation6 [shape = 's32[1]{0}', space=sflag, size = 0x4, scoped, tag = 'scoped memory for tpu_custom_call.1']
    #allocation7 [shape = 'u8[65536]{0}', space=vmem, size = 0x10000, scoped, tag = 'output window, operand 0, single buffered']
    %7 = vsyncpa [#allocation3], 0
    %8 = vsyncpa [#allocation6], 0
    %9 = vsyncpa [#allocation4], 0
    // Predicated region
    $region2: #{tpu_custom_call.1} parent=1 // pred_check
      _
    $region3: #{tpu_custom_call.1} parent=1 // pred_check_branch
      %11 = sbr.rel (0) target = $region5
    $region4: #{tpu_custom_call.1} parent=1 // pred_region
      %s13 = ssub.s32 2048, 2048
      %14 = vsyncadd [#allocation3], %s13
      %s15 = sshll.u32 [#allocation2], 4
      %s16 = int_to_ptr.vmem [resolvable:$true] %s15
      %21 = dma.hbm_to_vmem [thread:$0]  %s0, 2048, %s16, [#allocation3], 128, 128, 8
    $region5: #{tpu_custom_call.1} parent=1 // pred_fallthru
      _
    // Predicated region
    $region6: #{tpu_custom_call.1} parent=1 // pred_check
      _
    $region7: #{tpu_custom_call.1} parent=1 // pred_check_branch
      %23 = sbr.rel (0) target = $region9
    $region8: #{tpu_custom_call.1} parent=1 // pred_region
      %s25 = ssub.s32 2048, 2048
      %26 = vsyncadd [#allocation6], %s25
      %s27 = sshll.u32 [#allocation5], 4
      %s28 = int_to_ptr.vmem [resolvable:$true] %s27
      %33 = dma.hbm_to_vmem [thread:$0]  %s1, 2048, %s28, [#allocation6], 128, 128, 8
    $region9: #{tpu_custom_call.1} parent=1 // pred_fallthru
      _
    // Predicated region
    $region10: #{tpu_custom_call.1} parent=1 // pred_check
      _
    $region11: #{tpu_custom_call.1} parent=1 // pred_check_branch
      %35 = sbr.rel (0) target = $region13
    $region12: #{tpu_custom_call.1} parent=1 // pred_region
      %36 = dma.done [#allocation3], 2048
    $region13: #{tpu_custom_call.1} parent=1 // pred_fallthru
      _
    // Predicated region
    $region14: #{tpu_custom_call.1} parent=1 // pred_check
      _
    $region15: #{tpu_custom_call.1} parent=1 // pred_check_branch
      %38 = sbr.rel (0) target = $region17
    $region16: #{tpu_custom_call.1} parent=1 // pred_region
      %39 = dma.done [#allocation6], 2048
    $region17: #{tpu_custom_call.1} parent=1 // pred_fallthru
      _
    %v40 = vld [vmem:[#allocation2] sm:$0xff]
    %v41 = vld [vmem:[#allocation2 + $0x8] sm:$0xff]
    %v42 = vld [vmem:[#allocation2 + $0x10] sm:$0xff]
    %v43 = vld [vmem:[#allocation2 + $0x18] sm:$0xff]
    %v44 = vld [vmem:[#allocation2 + $0x20] sm:$0xff]
    %v45 = vld [vmem:[#allocation2 + $0x28] sm:$0xff]
    %v46 = vld [vmem:[#allocation2 + $0x30] sm:$0xff]
    %v47 = vld [vmem:[#allocation2 + $0x38] sm:$0xff]
    %v48 = vld [vmem:[#allocation2 + $0x40] sm:$0xff]
    %v49 = vld [vmem:[#allocation2 + $0x48] sm:$0xff]
    %v50 = vld [vmem:[#allocation2 + $0x50] sm:$0xff]
    %v51 = vld [vmem:[#allocation2 + $0x58] sm:$0xff]
    %v52 = vld [vmem:[#allocation2 + $0x60] sm:$0xff]
    %v53 = vld [vmem:[#allocation2 + $0x68] sm:$0xff]
    %v54 = vld [vmem:[#allocation2 + $0x70] sm:$0xff]
    %v55 = vld [vmem:[#allocation2 + $0x78] sm:$0xff]
    %v56 = vld [vmem:[#allocation5] sm:$0xff]
    %v57 = vld [vmem:[#allocation5 + $0x8] sm:$0xff]
    %v58 = vld [vmem:[#allocation5 + $0x10] sm:$0xff]
    %v59 = vld [vmem:[#allocation5 + $0x18] sm:$0xff]
    %v60 = vld [vmem:[#allocation5 + $0x20] sm:$0xff]
    %v61 = vld [vmem:[#allocation5 + $0x28] sm:$0xff]
    %v62 = vld [vmem:[#allocation5 + $0x30] sm:$0xff]
    %v63 = vld [vmem:[#allocation5 + $0x38] sm:$0xff]
    %v64 = vld [vmem:[#allocation5 + $0x40] sm:$0xff]
    %v65 = vld [vmem:[#allocation5 + $0x48] sm:$0xff]
    %v66 = vld [vmem:[#allocation5 + $0x50] sm:$0xff]
    %v67 = vld [vmem:[#allocation5 + $0x58] sm:$0xff]
    %v68 = vld [vmem:[#allocation5 + $0x60] sm:$0xff]
    %v69 = vld [vmem:[#allocation5 + $0x68] sm:$0xff]
    %v70 = vld [vmem:[#allocation5 + $0x70] sm:$0xff]
    %v71 = vld [vmem:[#allocation5 + $0x78] sm:$0xff]
    %72 = vmatprep.subr.mxu0 0.0
    %73 = vmatpush1.msra.mxu0 %v56
    %74 = vmatprep.subr.mxu0 0.0
    %75 = vmatpush1.msra.mxu0 %v57
    %76 = vmatprep.subr.mxu0 0.0
    %77 = vmatpush1.msra.mxu0 %v58
    %78 = vmatprep.subr.mxu0 0.0
    %79 = vmatpush1.msra.mxu0 %v59
    %80 = vmatprep.subr.mxu0 0.0
    %81 = vmatpush1.msra.mxu0 %v60
    %82 = vmatprep.subr.mxu0 0.0
    %83 = vmatpush1.msra.mxu0 %v61
    %84 = vmatprep.subr.mxu0 0.0
    %85 = vmatpush1.msra.mxu0 %v62
    %86 = vmatprep.subr.mxu0 0.0
    %87 = vmatpush1.msra.mxu0 %v63
    %88 = vmatprep.subr.mxu0 0.0
    %89 = vmatpush1.msra.mxu0 %v64
    %90 = vmatprep.subr.mxu0 0.0
    %91 = vmatpush1.msra.mxu0 %v65
    %92 = vmatprep.subr.mxu0 0.0
    %93 = vmatpush1.msra.mxu0 %v66
    %94 = vmatprep.subr.mxu0 0.0
    %95 = vmatpush1.msra.mxu0 %v67
    %96 = vmatprep.subr.mxu0 0.0
    %97 = vmatpush1.msra.mxu0 %v68
    %98 = vmatprep.subr.mxu0 0.0
    %99 = vmatpush1.msra.mxu0 %v69
    %100 = vmatprep.subr.mxu0 0.0
    %101 = vmatpush1.msra.mxu0 %v70
    %102 = vmatprep.subr.mxu0 0.0
    %103 = vmatpush1.msra.mxu0 %v71
    %104 = vmatprep.subr.mxu0 0.0
    %105 = vmatpush1.msra.mxu0 0.0
    %106 = vmatprep.subr.mxu0 0.0
    %107 = vmatpush1.msra.mxu0 0.0
    %108 = vmatprep.subr.mxu0 0.0
    %109 = vmatpush1.msra.mxu0 0.0
    %110 = vmatprep.subr.mxu0 0.0
    %111 = vmatpush1.msra.mxu0 0.0
    %112 = vmatprep.subr.mxu0 0.0
    %113 = vmatpush1.msra.mxu0 0.0
    %114 = vmatprep.subr.mxu0 0.0
    %115 = vmatpush1.msra.mxu0 0.0
    %116 = vmatprep.subr.mxu0 0.0
    %117 = vmatpush1.msra.mxu0 0.0
    %118 = vmatprep.subr.mxu0 0.0
    %119 = vmatpush1.msra.mxu0 0.0
    %120 = vmatprep.subr.mxu0 0.0
    %121 = vmatpush1.msra.mxu0 0.0
    %122 = vmatprep.subr.mxu0 0.0
    %123 = vmatpush1.msra.mxu0 0.0
    %124 = vmatprep.subr.mxu0 0.0
    %125 = vmatpush1.msra.mxu0 0.0
    %126 = vmatprep.subr.mxu0 0.0
    %127 = vmatpush1.msra.mxu0 0.0
    %128 = vmatprep.subr.mxu0 0.0
    %129 = vmatpush1.msra.mxu0 0.0
    %130 = vmatprep.subr.mxu0 0.0
    %131 = vmatpush1.msra.mxu0 0.0
    %132 = vmatprep.subr.mxu0 0.0
    %133 = vmatpush1.msra.mxu0 0.0
    %134 = vmatprep.subr.mxu0 0.0
    %135 = vmatpush1.msra.mxu0 0.0
    %136 = vmatprep.mubr.f32.mxu0 0.0
    %137 = vmatmul.mubr.f32.gmra.mrb[0].mxu0 %v40
    %v138 = vpop.f32.mrb[0].mxu0
    %v139 = vadd.f32 0.0, %v138
    %v140 = vpop.f32.mrb[0].mxu0
    %141 = vmatprep.mubr.f32.mxu0 0.0
    %142 = vmatmul.mubr.f32.gmra.mrb[0].mxu0 %v41
    %v143 = vpop.f32.mrb[0].mxu0
    %v144 = vadd.f32 0.0, %v143
    %v145 = vpop.f32.mrb[0].mxu0
    %146 = vmatprep.mubr.f32.mxu0 0.0
    %147 = vmatmul.mubr.f32.gmra.mrb[0].mxu0 %v42
    %v148 = vpop.f32.mrb[0].mxu0
    %v149 = vadd.f32 0.0, %v148
    %v150 = vpop.f32.mrb[0].mxu0
    %151 = vmatprep.mubr.f32.mxu0 0.0
    %152 = vmatmul.mubr.f32.gmra.mrb[0].mxu0 %v43
    %v153 = vpop.f32.mrb[0].mxu0
    %v154 = vadd.f32 0.0, %v153
    %v155 = vpop.f32.mrb[0].mxu0
    %156 = vmatprep.mubr.f32.mxu0 0.0
    %157 = vmatmul.mubr.f32.gmra.mrb[0].mxu0 %v44
    %v158 = vpop.f32.mrb[0].mxu0
    %v159 = vadd.f32 0.0, %v158
    %v160 = vpop.f32.mrb[0].mxu0
    %161 = vmatprep.mubr.f32.mxu0 0.0
    %162 = vmatmul.mubr.f32.gmra.mrb[0].mxu0 %v45
    %v163 = vpop.f32.mrb[0].mxu0
    %v164 = vadd.f32 0.0, %v163
    %v165 = vpop.f32.mrb[0].mxu0
    %166 = vmatprep.mubr.f32.mxu0 0.0
    %167 = vmatmul.mubr.f32.gmra.mrb[0].mxu0 %v46
    %v168 = vpop.f32.mrb[0].mxu0
    %v169 = vadd.f32 0.0, %v168
    %v170 = vpop.f32.mrb[0].mxu0
    %171 = vmatprep.mubr.f32.mxu0 0.0
    %172 = vmatmul.mubr.f32.gmra.mrb[0].mxu0 %v47
    %v173 = vpop.f32.mrb[0].mxu0
    %v174 = vadd.f32 0.0, %v173
    %v175 = vpop.f32.mrb[0].mxu0
    %176 = vmatprep.mubr.f32.mxu0 0.0
    %177 = vmatmul.mubr.f32.gmra.mrb[0].mxu0 %v48
    %v178 = vpop.f32.mrb[0].mxu0
    %v179 = vadd.f32 0.0, %v178
    %v180 = vpop.f32.mrb[0].mxu0
    %181 = vmatprep.mubr.f32.mxu0 0.0
    %182 = vmatmul.mubr.f32.gmra.mrb[0].mxu0 %v49
    %v183 = vpop.f32.mrb[0].mxu0
    %v184 = vadd.f32 0.0, %v183
    %v185 = vpop.f32.mrb[0].mxu0
    %186 = vmatprep.mubr.f32.mxu0 0.0
    %187 = vmatmul.mubr.f32.gmra.mrb[0].mxu0 %v50
    %v188 = vpop.f32.mrb[0].mxu0
    %v189 = vadd.f32 0.0, %v188
    %v190 = vpop.f32.mrb[0].mxu0
    %191 = vmatprep.mubr.f32.mxu0 0.0
    %192 = vmatmul.mubr.f32.gmra.mrb[0].mxu0 %v51
    %v193 = vpop.f32.mrb[0].mxu0
    %v194 = vadd.f32 0.0, %v193
    %v195 = vpop.f32.mrb[0].mxu0
    %196 = vmatprep.mubr.f32.mxu0 0.0
    %197 = vmatmul.mubr.f32.gmra.mrb[0].mxu0 %v52
    %v198 = vpop.f32.mrb[0].mxu0
    %v199 = vadd.f32 0.0, %v198
    %v200 = vpop.f32.mrb[0].mxu0
    %201 = vmatprep.mubr.f32.mxu0 0.0
    %202 = vmatmul.mubr.f32.gmra.mrb[0].mxu0 %v53
    %v203 = vpop.f32.mrb[0].mxu0
    %v204 = vadd.f32 0.0, %v203
    %v205 = vpop.f32.mrb[0].mxu0
    %206 = vmatprep.mubr.f32.mxu0 0.0
    %207 = vmatmul.mubr.f32.gmra.mrb[0].mxu0 %v54
    %v208 = vpop.f32.mrb[0].mxu0
    %v209 = vadd.f32 0.0, %v208
    %v210 = vpop.f32.mrb[0].mxu0
    %211 = vmatprep.mubr.f32.mxu0 0.0
    %212 = vmatmul.mubr.f32.gmra.mrb[0].mxu0 %v55
    %v213 = vpop.f32.mrb[0].mxu0
    %v214 = vadd.f32 0.0, %v213
    %v215 = vpop.f32.mrb[0].mxu0
    %216 = vdwg.mxu0
    %217 = vst [vmem:[#allocation7] sm:$0xff] %v139
    %218 = vst [vmem:[#allocation7 + $0x8] sm:$0xff] %v144
    %219 = vst [vmem:[#allocation7 + $0x10] sm:$0xff] %v149
    %220 = vst [vmem:[#allocation7 + $0x18] sm:$0xff] %v154
    %221 = vst [vmem:[#allocation7 + $0x20] sm:$0xff] %v159
    %222 = vst [vmem:[#allocation7 + $0x28] sm:$0xff] %v164
    %223 = vst [vmem:[#allocation7 + $0x30] sm:$0xff] %v169
    %224 = vst [vmem:[#allocation7 + $0x38] sm:$0xff] %v174
    %225 = vst [vmem:[#allocation7 + $0x40] sm:$0xff] %v179
    %226 = vst [vmem:[#allocation7 + $0x48] sm:$0xff] %v184
    %227 = vst [vmem:[#allocation7 + $0x50] sm:$0xff] %v189
    %228 = vst [vmem:[#allocation7 + $0x58] sm:$0xff] %v194
    %229 = vst [vmem:[#allocation7 + $0x60] sm:$0xff] %v199
    %230 = vst [vmem:[#allocation7 + $0x68] sm:$0xff] %v204
    %231 = vst [vmem:[#allocation7 + $0x70] sm:$0xff] %v209
    %232 = vst [vmem:[#allocation7 + $0x78] sm:$0xff] %v214
    // Predicated region
    $region18: #{tpu_custom_call.1} parent=1 // pred_check
      _
    $region19: #{tpu_custom_call.1} parent=1 // pred_check_branch
      %234 = sbr.rel (0) target = $region21
    $region20: #{tpu_custom_call.1} parent=1 // pred_region
      %s236 = ssub.s32 2048, 2048
      %237 = vsyncadd [#allocation4], %s236
      %s238 = sshll.u32 [#allocation7], 4
      %s239 = int_to_ptr.vmem [resolvable:$true] %s238
      %244 = dma.vmem_to_hbm [thread:$0]  %s239, 2048, %s2, [#allocation4], 128, 128, 8
    $region21: #{tpu_custom_call.1} parent=1 // pred_fallthru
      _
    // Predicated region
    $region22: #{tpu_custom_call.1} parent=1 // pred_check
      _
    $region23: #{tpu_custom_call.1} parent=1 // pred_check_branch
      %246 = sbr.rel (0) target = $region25
    $region24: #{tpu_custom_call.1} parent=1 // pred_region
      %247 = dma.done [#allocation4], 2048
    $region25: #{tpu_custom_call.1} parent=1 // pred_fallthru
      _
    %248 = vsyncpa [#allocation3], 1
    %249 = vsyncpa [#allocation6], 1
    %250 = vsyncpa [#allocation4], 1

</llo_original>
